<compile_context>
chip_gen: v7x
topology: tpu7x:2x2x1
jax: 0.10.0
libtpu: 0.0.40
codegen_flags: <defaults>
</compile_context>

<pallas_src>
import functools

import jax
import jax.numpy as jnp
from jax import lax
from jax.experimental import pallas as pl
from jax.experimental.pallas import tpu as pltpu

LN_EPS = 1e-5
_INV_SQRT2 = 0.7071067811865476


def _round_up(a: int, m: int) -> int:
    return (a + m - 1) // m * m


def _encoder_block_kernel(xph_ref, halo_ref, w_ref, b_ref, g_ref, beta_ref,
                          o_ref, *, K, stride, C_in, approximate_gelu):
    # Conv1d as K accumulated MXU matmuls.  For tap k (phase p = k % stride,
    # shift q = k // stride):   y[:, t] += W[:, :, k] @ x_phase_p[:, t + q]
    phases = [xph_ref[pl.ds(p * C_in, C_in), :] for p in range(stride)]
    y = None
    for k in range(K):
        p, q = k % stride, k // stride
        if q == 0:
            xs = phases[p]
        else:
            # Shift phase p left by q; the last q columns come from the tiny
            # per-tile halo (the first columns of the next time tile).
            halo_cols = halo_ref[pl.ds(p * C_in, C_in), pl.ds(0, q)]
            xs = jnp.concatenate([phases[p][:, q:], halo_cols], axis=1)
        part = jnp.dot(w_ref[k], xs, preferred_element_type=jnp.float32)
        y = part if y is None else y + part
    y = y + b_ref[...]                            # (C_out, 1) lane-broadcast
    # Dropout is identity at inference.
    # LayerNorm over channels (the sublane axis in this layout).
    mean = jnp.mean(y, axis=0, keepdims=True)     # (1, TT)
    c = y - mean
    var = jnp.mean(c * c, axis=0, keepdims=True)
    y = c * lax.rsqrt(var + LN_EPS)
    y = y * g_ref[...] + beta_ref[...]
    if approximate_gelu:
        # tanh GELU: moves the transcendental to the EUP slot (v5e VALU relief).
        y = 0.5 * y * (1.0 + jnp.tanh(0.7978845608028654 *
                                      (y + 0.044715 * y * y * y)))
    else:
        # Exact erf GELU (matches torch.nn.GELU() default).
        y = 0.5 * y * (1.0 + lax.erf(y * _INV_SQRT2))
    o_ref[...] = y.astype(o_ref.dtype)


def feature_encoder_block(x, w, b, gamma, beta, *, stride, tile_t=512,
                          approximate_gelu=False):
    """x: (B, C_in, L) NCL; w: (C_out, C_in, K); returns (B, C_out, L_out) NCL."""
    B, C_in, L = x.shape
    C_out, _, K = w.shape
    s = stride
    L_out = (L - K) // s + 1

    # Time-tile size: multiple of 128 (lane-dense stores / full MXU N width),
    # capped to the actual amount of work.
    tile_t = max(128, _round_up(tile_t, 128))
    TT = min(tile_t, _round_up(L_out, 128))
    L_pad = _round_up(L_out, TT)
    n_t = L_pad // TT

    Qmax = -(-K // s)                 # ceil(K / stride): taps per phase
    HW = max(Qmax - 1, 1)             # halo width per tile (>=1 keeps the spec well-formed)

    # Phase decomposition: x_ph[b, p, c, u] = x[b, c, u*s + p].  Same total size
    # as x (no K-fold im2col duplication); a single wrapper copy pass.
    U = L_pad + Qmax - 1
    need = U * s
    if need <= L:
        x_t = x[:, :, :need]
    else:
        x_t = jnp.pad(x, ((0, 0), (0, 0), (0, need - L)))
    x_phf = x_t.reshape(B, C_in, U, s).transpose(0, 3, 1, 2)      # (B, s, C_in, U)
    xph = x_phf[:, :, :, :L_pad].reshape(B, s * C_in, L_pad)

    # Per-tile halo: first (Qmax-1) phase columns of the *next* tile, needed by
    # taps with shift q >= 1.  Tiny: (B, n_t, s*C_in, Qmax-1).
    if Qmax > 1:
        u_idx = ((jnp.arange(n_t) + 1)[:, None] * TT
                 + jnp.arange(Qmax - 1)[None, :]).reshape(-1)
        halo = jnp.take(x_phf, u_idx, axis=3)                     # (B, s, C_in, n_t*(Qmax-1))
        halo = halo.reshape(B, s, C_in, n_t, Qmax - 1)
        halo = halo.transpose(0, 3, 1, 2, 4).reshape(B, n_t, s * C_in, Qmax - 1)
    else:
        halo = jnp.zeros((B, n_t, s * C_in, HW), x.dtype)

    # Per-tap weights (K, C_out, C_in): tiny one-time transpose, then VMEM
    # resident via a constant index map.
    w_t = jnp.transpose(w, (2, 0, 1))
    b2 = b.reshape(C_out, 1)
    g2 = gamma.reshape(C_out, 1)
    beta2 = beta.reshape(C_out, 1)

    # VMEM budget: double-buffered x/halo/out tiles + resident params + headroom,
    # kept under v7x's 64 MiB physical VMEM (default scoped limit is 32 MiB).
    itemsize = 4
    need_b = (2 * (s * C_in * TT + C_out * TT + s * C_in * HW)
              + 2 * (K * C_out * C_in + 3 * C_out)) * itemsize
    vmem_limit = int(min(max(need_b + (4 << 20), 32 << 20), 48 << 20))

    kernel = functools.partial(_encoder_block_kernel, K=K, stride=s, C_in=C_in,
                               approximate_gelu=approximate_gelu)

    out = pl.pallas_call(
        kernel,
        out_shape=jax.ShapeDtypeStruct((B, C_out, L_pad), x.dtype),
        grid_spec=pl.GridSpec(
            grid=(B, n_t),
            in_specs=[
                # phase-decomposed time tiles: pipelined / double-buffered
                pl.BlockSpec((None, s * C_in, TT), lambda bb, i: (bb, 0, i)),
                # per-tile halo columns (tiny)
                pl.BlockSpec((None, None, s * C_in, HW),
                             lambda bb, i: (bb, i, 0, 0)),
                # per-tap weights + params: constant index map -> VMEM resident
                pl.BlockSpec((K, C_out, C_in), lambda bb, i: (0, 0, 0)),
                pl.BlockSpec((C_out, 1), lambda bb, i: (0, 0)),
                pl.BlockSpec((C_out, 1), lambda bb, i: (0, 0)),
                pl.BlockSpec((C_out, 1), lambda bb, i: (0, 0)),
            ],
            out_specs=pl.BlockSpec((None, C_out, TT), lambda bb, i: (bb, 0, i)),
        ),
        compiler_params=pltpu.CompilerParams(
            dimension_semantics=("parallel", "parallel"),
            vmem_limit_bytes=vmem_limit),
    )(xph, halo, w_t, b2, g2, beta2)

    if L_pad != L_out:
        out = out[:, :, :L_out]   # drop padded time columns (garbage)
    return out                    # (B, C_out, L_out) -- PyTorch NCL


def _reference(x, w, b, gamma, beta, *, stride):
    """Pure-JAX reference mirroring the PyTorch module (eval mode)."""
    y = lax.conv_general_dilated(
        x, w, window_strides=(stride,), padding="VALID",
        dimension_numbers=("NCH", "OIH", "NCH"),
        precision=lax.Precision.HIGHEST)
    y = y + b[None, :, None]
    yt = jnp.transpose(y, (0, 2, 1))
    mean = jnp.mean(yt, axis=-1, keepdims=True)
    var = jnp.mean((yt - mean) ** 2, axis=-1, keepdims=True)
    yt = (yt - mean) / jnp.sqrt(var + LN_EPS) * gamma + beta
    yt = 0.5 * yt * (1.0 + lax.erf(yt / jnp.sqrt(2.0)))
    return jnp.transpose(yt, (0, 2, 1))


if __name__ == "__main__":
    def run_case(B, C_in, L, C_out, K, stride, tile_t):
        key = jax.random.PRNGKey(0)
        kx, kw, kb, kg, kbeta = jax.random.split(key, 5)
        x = jax.random.normal(kx, (B, C_in, L), dtype=jnp.float32)
        w = 0.1 * jax.random.normal(kw, (C_out, C_in, K), dtype=jnp.float32)
        b = 0.1 * jax.random.normal(kb, (C_out,), dtype=jnp.float32)
        gamma = 1.0 + 0.05 * jax.random.normal(kg, (C_out,), dtype=jnp.float32)
        beta = 0.05 * jax.random.normal(kbeta, (C_out,), dtype=jnp.float32)

        out = jax.block_until_ready(
            feature_encoder_block(x, w, b, gamma, beta, stride=stride,
                                  tile_t=tile_t))
        ref = jax.block_until_ready(
            _reference(x, w, b, gamma, beta, stride=stride))
        L_out = (L - K) // stride + 1
        assert out.shape == (B, C_out, L_out), out.shape
        err = float(jnp.max(jnp.abs(out - ref)))
        assert jnp.allclose(out, ref, atol=1e-4, rtol=1e-4), err

    # Cross-tile halo path (K > stride), 2 batches x 2 time tiles per batch.
    run_case(B=2, C_in=4, L=513, C_out=32, K=3, stride=2, tile_t=128)
    # No-halo path (K <= stride), as in the final wav2vec2 conv layers.
    run_case(B=2, C_in=4, L=260, C_out=32, K=2, stride=2, tile_t=128)

    print("KERNEL_OK")
</pallas_src>

<mosaic_0001>
module attributes {stable_mosaic.version = 11 : i64} {
  func.func @_encoder_block_kernel(%arg0: i32, %arg1: i32, %arg2: memref<1x8x128xf32, #tpu.memory_space<vmem>>, %arg3: memref<1x1x8x1xf32, #tpu.memory_space<vmem>>, %arg4: memref<3x32x4xf32, #tpu.memory_space<vmem>>, %arg5: memref<32x1xf32, #tpu.memory_space<vmem>>, %arg6: memref<32x1xf32, #tpu.memory_space<vmem>>, %arg7: memref<32x1xf32, #tpu.memory_space<vmem>>, %arg8: memref<1x32x128xf32, #tpu.memory_space<vmem>>) attributes {dimension_semantics = [#tpu.dimension_semantics<parallel>, #tpu.dimension_semantics<parallel>], iteration_bounds = array<i64: 2, 2>, scalar_prefetch = 0 : i64, scratch_operands = 0 : i64, tpu.core_type = #tpu.core_type<tc>, window_params = [{transform_indices = @transform_0, window_bounds = array<i64: 1, 8, 128>}, {transform_indices = @transform_1, window_bounds = array<i64: 1, 1, 8, 1>}, {pipeline_mode = #tpu.pipeline_mode<synchronous>, transform_indices = @transform_2, window_bounds = array<i64: 3, 32, 4>}, {pipeline_mode = #tpu.pipeline_mode<synchronous>, transform_indices = @transform_3, window_bounds = array<i64: 32, 1>}, {pipeline_mode = #tpu.pipeline_mode<synchronous>, transform_indices = @transform_4, window_bounds = array<i64: 32, 1>}, {pipeline_mode = #tpu.pipeline_mode<synchronous>, transform_indices = @transform_5, window_bounds = array<i64: 32, 1>}, {transform_indices = @transform_6, window_bounds = array<i64: 1, 32, 128>}]} {
    %c0 = arith.constant 0 : index
    %c0_0 = arith.constant 0 : index
    %c0_1 = arith.constant 0 : index
    %0 = vector.load %arg2[%c0, %c0_0, %c0_1] : memref<1x8x128xf32, #tpu.memory_space<vmem>>, vector<1x4x128xf32>
    %1 = vector.shape_cast %0 : vector<1x4x128xf32> to vector<4x128xf32>
    %c0_2 = arith.constant 0 : index
    %c4 = arith.constant 4 : index
    %c0_3 = arith.constant 0 : index
    %2 = vector.load %arg2[%c0_2, %c4, %c0_3] : memref<1x8x128xf32, #tpu.memory_space<vmem>>, vector<1x4x128xf32>
    %3 = vector.shape_cast %2 : vector<1x4x128xf32> to vector<4x128xf32>
    %c0_4 = arith.constant 0 : index
    %c0_5 = arith.constant 0 : index
    %c0_6 = arith.constant 0 : index
    %4 = vector.load %arg4[%c0_4, %c0_5, %c0_6] : memref<3x32x4xf32, #tpu.memory_space<vmem>>, vector<1x32x4xf32>
    %5 = vector.shape_cast %4 : vector<1x32x4xf32> to vector<32x4xf32>
    %cst = arith.constant dense<0.000000e+00> : vector<32x128xf32>
    %6 = tpu.matmul %5, %1, %cst {dimension_numbers = #tpu.dot_dimension_numbers<[1], [0], [0], [1], [0, 0, 1, 1], [], []>} : vector<32x4xf32>, vector<4x128xf32>, vector<32x128xf32> -> vector<32x128xf32>
    %c1 = arith.constant 1 : index
    %c0_7 = arith.constant 0 : index
    %c0_8 = arith.constant 0 : index
    %7 = vector.load %arg4[%c1, %c0_7, %c0_8] : memref<3x32x4xf32, #tpu.memory_space<vmem>>, vector<1x32x4xf32>
    %8 = vector.shape_cast %7 : vector<1x32x4xf32> to vector<32x4xf32>
    %cst_9 = arith.constant dense<0.000000e+00> : vector<32x128xf32>
    %9 = tpu.matmul %8, %3, %cst_9 {dimension_numbers = #tpu.dot_dimension_numbers<[1], [0], [0], [1], [0, 0, 1, 1], [], []>} : vector<32x4xf32>, vector<4x128xf32>, vector<32x128xf32> -> vector<32x128xf32>
    %10 = arith.addf %6, %9 : vector<32x128xf32>
    %c0_10 = arith.constant 0 : index
    %c0_11 = arith.constant 0 : index
    %c0_12 = arith.constant 0 : index
    %c0_13 = arith.constant 0 : index
    %11 = vector.load %arg3[%c0_10, %c0_11, %c0_12, %c0_13] : memref<1x1x8x1xf32, #tpu.memory_space<vmem>>, vector<1x1x4x1xf32>
    %12 = vector.shape_cast %11 : vector<1x1x4x1xf32> to vector<4x1xf32>
    %13 = vector.extract_strided_slice %1 {offsets = [0, 1], sizes = [4, 127], strides = [1, 1]} : vector<4x128xf32> to vector<4x127xf32>
    %14 = tpu.concatenate %13, %12 in 1 : vector<4x127xf32>, vector<4x1xf32> -> vector<4x128xf32>
    %c2 = arith.constant 2 : index
    %c0_14 = arith.constant 0 : index
    %c0_15 = arith.constant 0 : index
    %15 = vector.load %arg4[%c2, %c0_14, %c0_15] : memref<3x32x4xf32, #tpu.memory_space<vmem>>, vector<1x32x4xf32>
    %16 = vector.shape_cast %15 : vector<1x32x4xf32> to vector<32x4xf32>
    %cst_16 = arith.constant dense<0.000000e+00> : vector<32x128xf32>
    %17 = tpu.matmul %16, %14, %cst_16 {dimension_numbers = #tpu.dot_dimension_numbers<[1], [0], [0], [1], [0, 0, 1, 1], [], []>} : vector<32x4xf32>, vector<4x128xf32>, vector<32x128xf32> -> vector<32x128xf32>
    %18 = arith.addf %10, %17 : vector<32x128xf32>
    %c0_17 = arith.constant 0 : index
    %c0_18 = arith.constant 0 : index
    %19 = vector.load %arg5[%c0_17, %c0_18] : memref<32x1xf32, #tpu.memory_space<vmem>>, vector<32x1xf32>
    %20 = vector.broadcast %19 : vector<32x1xf32> to vector<32x128xf32>
    %21 = arith.addf %18, %20 : vector<32x128xf32>
    %cst_19 = arith.constant dense<0.000000e+00> : vector<128xf32>
    %22 = vector.multi_reduction <add>, %21, %cst_19 [0] : vector<32x128xf32> to vector<128xf32>
    %23 = vector.shape_cast %22 : vector<128xf32> to vector<1x128xf32>
    %cst_20 = arith.constant 3.200000e+01 : f32
    %24 = vector.broadcast %cst_20 : f32 to vector<1x128xf32>
    %25 = arith.divf %23, %24 : vector<1x128xf32>
    %26 = vector.broadcast %25 : vector<1x128xf32> to vector<32x128xf32>
    %27 = arith.subf %21, %26 : vector<32x128xf32>
    %28 = arith.mulf %27, %27 : vector<32x128xf32>
    %cst_21 = arith.constant dense<0.000000e+00> : vector<128xf32>
    %29 = vector.multi_reduction <add>, %28, %cst_21 [0] : vector<32x128xf32> to vector<128xf32>
    %30 = vector.shape_cast %29 : vector<128xf32> to vector<1x128xf32>
    %cst_22 = arith.constant 3.200000e+01 : f32
    %31 = vector.broadcast %cst_22 : f32 to vector<1x128xf32>
    %32 = arith.divf %30, %31 : vector<1x128xf32>
    %cst_23 = arith.constant 9.99999974E-6 : f32
    %33 = vector.broadcast %cst_23 : f32 to vector<1x128xf32>
    %34 = arith.addf %32, %33 : vector<1x128xf32>
    %35 = math.rsqrt %34 : vector<1x128xf32>
    %36 = vector.broadcast %35 : vector<1x128xf32> to vector<32x128xf32>
    %37 = arith.mulf %27, %36 : vector<32x128xf32>
    %c0_24 = arith.constant 0 : index
    %c0_25 = arith.constant 0 : index
    %38 = vector.load %arg6[%c0_24, %c0_25] : memref<32x1xf32, #tpu.memory_space<vmem>>, vector<32x1xf32>
    %39 = vector.broadcast %38 : vector<32x1xf32> to vector<32x128xf32>
    %40 = arith.mulf %37, %39 : vector<32x128xf32>
    %c0_26 = arith.constant 0 : index
    %c0_27 = arith.constant 0 : index
    %41 = vector.load %arg7[%c0_26, %c0_27] : memref<32x1xf32, #tpu.memory_space<vmem>>, vector<32x1xf32>
    %42 = vector.broadcast %41 : vector<32x1xf32> to vector<32x128xf32>
    %43 = arith.addf %40, %42 : vector<32x128xf32>
    %cst_28 = arith.constant 5.000000e-01 : f32
    %44 = vector.broadcast %cst_28 : f32 to vector<32x128xf32>
    %45 = arith.mulf %44, %43 : vector<32x128xf32>
    %cst_29 = arith.constant 0.707106769 : f32
    %46 = vector.broadcast %cst_29 : f32 to vector<32x128xf32>
    %47 = arith.mulf %43, %46 : vector<32x128xf32>
    %48 = math.erf %47 : vector<32x128xf32>
    %cst_30 = arith.constant 1.000000e+00 : f32
    %49 = vector.broadcast %cst_30 : f32 to vector<32x128xf32>
    %50 = arith.addf %49, %48 : vector<32x128xf32>
    %51 = arith.mulf %45, %50 : vector<32x128xf32>
    %c0_31 = arith.constant 0 : index
    %c0_32 = arith.constant 0 : index
    %c0_33 = arith.constant 0 : index
    %52 = vector.load %arg8[%c0_31, %c0_32, %c0_33] : memref<1x32x128xf32, #tpu.memory_space<vmem>>, vector<1x32x128xf32>
    %53 = vector.shape_cast %52 : vector<1x32x128xf32> to vector<32x128xf32>
    %54 = vector.shape_cast %51 : vector<32x128xf32> to vector<1x32x128xf32>
    tpu.vector_store %arg8[%c0_31, %c0_32, %c0_33], %54 {strides = array<i32>} : memref<1x32x128xf32, #tpu.memory_space<vmem>>, vector<1x32x128xf32>,
    return
  }
  func.func @transform_0(%arg0: i32, %arg1: i32) -> (i32, i32, i32) {
    %c0_i32 = arith.constant 0 : i32
    %c0_i32_0 = arith.constant 0 : i32
    return %arg0, %c0_i32, %arg1 : i32, i32, i32
  }
  func.func @transform_1(%arg0: i32, %arg1: i32) -> (i32, i32, i32, i32) {
    %c0_i32 = arith.constant 0 : i32
    %c0_i32_0 = arith.constant 0 : i32
    %c0_i32_1 = arith.constant 0 : i32
    return %arg0, %arg1, %c0_i32, %c0_i32_0 : i32, i32, i32, i32
  }
  func.func @transform_2(%arg0: i32, %arg1: i32) -> (i32, i32, i32) {
    %c0_i32 = arith.constant 0 : i32
    %c0_i32_0 = arith.constant 0 : i32
    %c0_i32_1 = arith.constant 0 : i32
    %c0_i32_2 = arith.constant 0 : i32
    return %c0_i32, %c0_i32_0, %c0_i32_1 : i32, i32, i32
  }
  func.func @transform_3(%arg0: i32, %arg1: i32) -> (i32, i32) {
    %c0_i32 = arith.constant 0 : i32
    %c0_i32_0 = arith.constant 0 : i32
    %c0_i32_1 = arith.constant 0 : i32
    return %c0_i32, %c0_i32_0 : i32, i32
  }
  func.func @transform_4(%arg0: i32, %arg1: i32) -> (i32, i32) {
    %c0_i32 = arith.constant 0 : i32
    %c0_i32_0 = arith.constant 0 : i32
    %c0_i32_1 = arith.constant 0 : i32
    return %c0_i32, %c0_i32_0 : i32, i32
  }
  func.func @transform_5(%arg0: i32, %arg1: i32) -> (i32, i32) {
    %c0_i32 = arith.constant 0 : i32
    %c0_i32_0 = arith.constant 0 : i32
    %c0_i32_1 = arith.constant 0 : i32
    return %c0_i32, %c0_i32_0 : i32, i32
  }
  func.func @transform_6(%arg0: i32, %arg1: i32) -> (i32, i32, i32) {
    %c0_i32 = arith.constant 0 : i32
    %c0_i32_0 = arith.constant 0 : i32
    return %arg0, %c0_i32, %arg1 : i32, i32, i32
  }
}

</mosaic_0001>

<llo_original>
// kernel: tpu_custom_call.1
$region0: #{tpu_custom_call.1}
  #allocation0 [shape = 'u32[]', space=smem, size = 0x4, offset = 0x4, fixed_abs, tag = 'smem constant byte address 0x4 - core index']
  #allocation1 [shape = 'u32[144,128]{1,0:T(1,128)}', space=vmem, size = 0x12000, scoped, tag = 'internal scratch']
  %s0 = inlined_call_operand.vmem [shape: f32[2,8,256], index: 0, kind: input, shape index: {}]
  %s1 = inlined_call_operand.vmem [shape: f32[2,2,8,1], index: 1, kind: input, shape index: {}]
  %s2 = inlined_call_operand.vmem [shape: f32[3,32,4], index: 2, kind: input, shape index: {}]
  %s3 = inlined_call_operand.vmem [shape: f32[32,1], index: 3, kind: input, shape index: {}]
  %s4 = inlined_call_operand.vmem [shape: f32[32,1], index: 4, kind: input, shape index: {}]
  %s5 = inlined_call_operand.vmem [shape: f32[32,1], index: 5, kind: input, shape index: {}]
  %s6 = inlined_call_operand.hbm [shape: f32[2,32,256], index: 6, kind: output, shape index: {}]
  %s7 = sld [smem:[#allocation0]]
  $region57: #{tpu_custom_call.1} parent=0
    _
  %s9 = ssub.s32 1, %s7
  %s10 = scalar_select 0, %s9, %s7
  $region1: #{tpu_custom_call.1} parent=0
    #allocation2 [shape = 'u8[32768]{0}', space=vmem, size = 0x8000, scoped, tag = 'output window, operand 0']
    #allocation3 [shape = 's32[2]{0}', space=sflag, size = 0x8, scoped, tag = 'scoped memory for tpu_custom_call.1']
    %11 = vsyncpa [#allocation3], 0
    %s12 = scalar_lea.sflag [#allocation3], 1
    %13 = vsyncpa %s12, 0
    loop: start=0, step=1, limit=6
    $region2: #{tpu_custom_call.1} parent=1 // loop_pre_header
      _
    $region3: #{tpu_custom_call.1} parent=1 // loop_header
      %s15 = sphi 0, %s19
      %p16 = scmp.ge.s32.totalorder %s15, 6
      %s22 = sphi 0, %s34
      %s23 = sphi 0, %s30
      %s24 = sphi 0, %s22
      %s25 = sphi 0, %s23
      %s26 = sphi 0, %s24
      %s27 = sphi 0, %s25
      %s39 = sphi 0, %s41
      %s42 = sphi 0, %s39
      %s43 = sphi 0, %s42
      %s59 = sphi 0, %s43
      %s67 = sphi 0, %s69
      %s70 = sphi 0, %s67
      %s71 = sphi 0, %s70
      %s87 = sphi 0, %s71
      %s91 = sphi 0, %s91
      %s93 = sphi 0, %s91
      %s94 = sphi 0, %s93
      %s108 = sphi 0, %s94
      %s112 = sphi 0, %s112
      %s114 = sphi 0, %s112
      %s115 = sphi 0, %s114
      %s129 = sphi 0, %s115
      %s133 = sphi 0, %s133
      %s135 = sphi 0, %s133
      %s136 = sphi 0, %s135
      %s150 = sphi 0, %s136
      %s154 = sphi 0, %s154
      %s156 = sphi 0, %s154
      %s157 = sphi 0, %s156
      %s171 = sphi 0, %s157
      %s179 = sphi 0, %s181
      %s182 = sphi 0, %s179
      %s183 = sphi 0, %s182
      %s199 = sphi 0, %s183
    $region4: #{tpu_custom_call.1} parent=1 // loop_header_branch
      %18 = sbr.rel (%p16) target = $region8
    $region5: #{tpu_custom_call.1} parent=1 // loop_body
      %s20 = ssub.s32 %s15, 1
      %s21 = ssub.s32 %s15, 2
      %s28 = sadd.s32 1, %s23
      %p29 = scmp.ge.s32.totalorder %s28, 2
      %s30 = scalar_select %p29, 0, %s28
      %s31 = sadd.s32 1, %s22
      %s32 = scalar_select %p29, %s31, %s22
      %p33 = scmp.ge.s32.totalorder %s32, 2
      %s34 = scalar_select %p33, 0, %s32
      %s35 = ssub.s32 %s22, %s34
      %s36 = ssub.s32 %s23, %s30
      %s37 = sor.u32 %s35, %s36
      %p38 = scmp.eq.s32.totalorder %s37, 0
      %s40 = sadd.s32 %s39, 1
      %s41 = scalar_select %p38, %s39, %s40
      %p44 = pneg %p38
      %p45 = scmp.eq.s32.totalorder %s15, 3
      %p46 = por %p44, %p45
      %p47 = scmp.ne.s32.totalorder %s39, %s42
      %p48 = scmp.eq.s32.totalorder %s15, 0
      %p49 = por %p47, %p48
      %p50 = scmp.ne.s32.totalorder %s39, %s42
      %p51 = scmp.eq.s32.totalorder %s20, 3
      %p52 = por %p50, %p51
      %p53 = scmp.ne.s32.totalorder %s42, %s43
      %p54 = scmp.eq.s32.totalorder %s20, 0
      %p55 = por %p53, %p54
      %p56 = scmp.ne.s32.totalorder %s42, %s43
      %p57 = scmp.eq.s32.totalorder %s21, 3
      %p58 = por %p56, %p57
      %p60 = scmp.ne.s32.totalorder %s43, %s59
      %p61 = scmp.eq.s32.totalorder %s21, 0
      %p62 = por %p60, %p61
      %s63 = ssub.s32 %s22, %s34
      %s64 = ssub.s32 %s23, %s30
      %s65 = sor.u32 %s63, %s64
      %p66 = scmp.eq.s32.totalorder %s65, 0
      %s68 = sadd.s32 %s67, 1
      %s69 = scalar_select %p66, %s67, %s68
      %p72 = pneg %p66
      %p73 = scmp.eq.s32.totalorder %s15, 3
      %p74 = por %p72, %p73
      %p75 = scmp.ne.s32.totalorder %s67, %s70
      %p76 = scmp.eq.s32.totalorder %s15, 0
      %p77 = por %p75, %p76
      %p78 = scmp.ne.s32.totalorder %s67, %s70
      %p79 = scmp.eq.s32.totalorder %s20, 3
      %p80 = por %p78, %p79
      %p81 = scmp.ne.s32.totalorder %s70, %s71
      %p82 = scmp.eq.s32.totalorder %s20, 0
      %p83 = por %p81, %p82
      %p84 = scmp.ne.s32.totalorder %s70, %s71
      %p85 = scmp.eq.s32.totalorder %s21, 3
      %p86 = por %p84, %p85
      %p88 = scmp.ne.s32.totalorder %s71, %s87
      %p89 = scmp.eq.s32.totalorder %s21, 0
      %p90 = por %p88, %p89
      %s92 = sadd.s32 %s91, 1
      %p95 = scmp.eq.s32.totalorder %s15, 3
      %p96 = scmp.ne.s32.totalorder %s91, %s93
      %p97 = scmp.eq.s32.totalorder %s15, 0
      %p98 = por %p96, %p97
      %p99 = scmp.ne.s32.totalorder %s91, %s93
      %p100 = scmp.eq.s32.totalorder %s20, 3
      %p101 = por %p99, %p100
      %p102 = scmp.ne.s32.totalorder %s93, %s94
      %p103 = scmp.eq.s32.totalorder %s20, 0
      %p104 = por %p102, %p103
      %p105 = scmp.ne.s32.totalorder %s93, %s94
      %p106 = scmp.eq.s32.totalorder %s21, 3
      %p107 = por %p105, %p106
      %p109 = scmp.ne.s32.totalorder %s94, %s108
      %p110 = scmp.eq.s32.totalorder %s21, 0
      %p111 = por %p109, %p110
      %s113 = sadd.s32 %s112, 1
      %p116 = scmp.eq.s32.totalorder %s15, 3
      %p117 = scmp.ne.s32.totalorder %s112, %s114
      %p118 = scmp.eq.s32.totalorder %s15, 0
      %p119 = por %p117, %p118
      %p120 = scmp.ne.s32.totalorder %s112, %s114
      %p121 = scmp.eq.s32.totalorder %s20, 3
      %p122 = por %p120, %p121
      %p123 = scmp.ne.s32.totalorder %s114, %s115
      %p124 = scmp.eq.s32.totalorder %s20, 0
      %p125 = por %p123, %p124
      %p126 = scmp.ne.s32.totalorder %s114, %s115
      %p127 = scmp.eq.s32.totalorder %s21, 3
      %p128 = por %p126, %p127
      %p130 = scmp.ne.s32.totalorder %s115, %s129
      %p131 = scmp.eq.s32.totalorder %s21, 0
      %p132 = por %p130, %p131
      %s134 = sadd.s32 %s133, 1
      %p137 = scmp.eq.s32.totalorder %s15, 3
      %p138 = scmp.ne.s32.totalorder %s133, %s135
      %p139 = scmp.eq.s32.totalorder %s15, 0
      %p140 = por %p138, %p139
      %p141 = scmp.ne.s32.totalorder %s133, %s135
      %p142 = scmp.eq.s32.totalorder %s20, 3
      %p143 = por %p141, %p142
      %p144 = scmp.ne.s32.totalorder %s135, %s136
      %p145 = scmp.eq.s32.totalorder %s20, 0
      %p146 = por %p144, %p145
      %p147 = scmp.ne.s32.totalorder %s135, %s136
      %p148 = scmp.eq.s32.totalorder %s21, 3
      %p149 = por %p147, %p148
      %p151 = scmp.ne.s32.totalorder %s136, %s150
      %p152 = scmp.eq.s32.totalorder %s21, 0
      %p153 = por %p151, %p152
      %s155 = sadd.s32 %s154, 1
      %p158 = scmp.eq.s32.totalorder %s15, 3
      %p159 = scmp.ne.s32.totalorder %s154, %s156
      %p160 = scmp.eq.s32.totalorder %s15, 0
      %p161 = por %p159, %p160
      %p162 = scmp.ne.s32.totalorder %s154, %s156
      %p163 = scmp.eq.s32.totalorder %s20, 3
      %p164 = por %p162, %p163
      %p165 = scmp.ne.s32.totalorder %s156, %s157
      %p166 = scmp.eq.s32.totalorder %s20, 0
      %p167 = por %p165, %p166
      %p168 = scmp.ne.s32.totalorder %s156, %s157
      %p169 = scmp.eq.s32.totalorder %s21, 3
      %p170 = por %p168, %p169
      %p172 = scmp.ne.s32.totalorder %s157, %s171
      %p173 = scmp.eq.s32.totalorder %s21, 0
      %p174 = por %p172, %p173
      %s175 = ssub.s32 %s22, %s34
      %s176 = ssub.s32 %s23, %s30
      %s177 = sor.u32 %s175, %s176
      %p178 = scmp.eq.s32.totalorder %s177, 0
      %s180 = sadd.s32 %s179, 1
      %s181 = scalar_select %p178, %s179, %s180
      %p184 = pneg %p178
      %p185 = scmp.eq.s32.totalorder %s15, 3
      %p186 = por %p184, %p185
      %p187 = scmp.ne.s32.totalorder %s179, %s182
      %p188 = scmp.eq.s32.totalorder %s15, 0
      %p189 = por %p187, %p188
      %p190 = scmp.ne.s32.totalorder %s179, %s182
      %p191 = scmp.eq.s32.totalorder %s20, 3
      %p192 = por %p190, %p191
      %p193 = scmp.ne.s32.totalorder %s182, %s183
      %p194 = scmp.eq.s32.totalorder %s20, 0
      %p195 = por %p193, %p194
      %p196 = scmp.ne.s32.totalorder %s182, %s183
      %p197 = scmp.eq.s32.totalorder %s21, 3
      %p198 = por %p196, %p197
      %p200 = scmp.ne.s32.totalorder %s183, %s199
      %p201 = scmp.eq.s32.totalorder %s21, 0
      %p202 = por %p200, %p201
      %p203 = scmp.le.s32.totalorder 1, %s15
      %p204 = scmp.lt.s32.totalorder %s15, 5
      %p205 = pnand %p203, %p204
      %p206 = pneg %p205
      // Predicated region
      $region9: #{tpu_custom_call.1} parent=5 // pred_check
        _
      $region10: #{tpu_custom_call.1} parent=5 // pred_check_branch
        %208 = sbr.rel (%p205) target = $region12
      $region11: #{tpu_custom_call.1} parent=5 // pred_region
        %s209 = ssub.s32 %s15, 1
        // Predicated region
        $region13: #{tpu_custom_call.1} parent=11 // pred_check
          %p210 = pneg %p104
        $region14: #{tpu_custom_call.1} parent=11 // pred_check_branch
          %212 = sbr.rel (%p210) target = $region16
        $region15: #{tpu_custom_call.1} parent=11 // pred_region
          _
        $region16: #{tpu_custom_call.1} parent=11 // pred_fallthru
          _
        // Predicated region
        $region17: #{tpu_custom_call.1} parent=11 // pred_check
          %p213 = pneg %p125
        $region18: #{tpu_custom_call.1} parent=11 // pred_check_branch
          %215 = sbr.rel (%p213) target = $region20
        $region19: #{tpu_custom_call.1} parent=11 // pred_region
          _
        $region20: #{tpu_custom_call.1} parent=11 // pred_fallthru
          _
        // Predicated region
        $region21: #{tpu_custom_call.1} parent=11 // pred_check
          %p216 = pneg %p146
        $region22: #{tpu_custom_call.1} parent=11 // pred_check_branch
          %218 = sbr.rel (%p216) target = $region24
        $region23: #{tpu_custom_call.1} parent=11 // pred_region
          _
        $region24: #{tpu_custom_call.1} parent=11 // pred_fallthru
          _
        // Predicated region
        $region25: #{tpu_custom_call.1} parent=11 // pred_check
          %p219 = pneg %p167
        $region26: #{tpu_custom_call.1} parent=11 // pred_check_branch
          %221 = sbr.rel (%p219) target = $region28
        $region27: #{tpu_custom_call.1} parent=11 // pred_region
          _
        $region28: #{tpu_custom_call.1} parent=11 // pred_fallthru
          _
      $region12: #{tpu_custom_call.1} parent=5 // pred_fallthru
        _
      %p222 = scmp.lt.s32.totalorder %s15, 4
      // Predicated region
      $region29: #{tpu_custom_call.1} parent=5 // pred_check
        %p223 = pneg %p222
      $region30: #{tpu_custom_call.1} parent=5 // pred_check_branch
        %225 = sbr.rel (%p223) target = $region32
      $region31: #{tpu_custom_call.1} parent=5 // pred_region
        // Predicated region
        $region33: #{tpu_custom_call.1} parent=31 // pred_check
          %p226 = pneg %p49
        $region34: #{tpu_custom_call.1} parent=31 // pred_check_branch
          %228 = sbr.rel (%p226) target = $region36
        $region35: #{tpu_custom_call.1} parent=31 // pred_region
          %p229 = scmp.lt.s32.totalorder %s22, 1
          %s230 = scalar_select %p229, %s22, 1
          %p231 = scmp.lt.s32.totalorder %s23, 1
          %s232 = scalar_select %p231, %s23, 1
          %s233 = smul.addr %s230, 2
          %s234 = sadd.s32 %s232, %s233
          %s235 = smul.addr %s234, 8
          %s236 = scalar_lea.vmem %s0, %s235
        $region36: #{tpu_custom_call.1} parent=31 // pred_fallthru
          _
        // Predicated region
        $region37: #{tpu_custom_call.1} parent=31 // pred_check
          %p237 = pneg %p77
        $region38: #{tpu_custom_call.1} parent=31 // pred_check_branch
          %239 = sbr.rel (%p237) target = $region40
        $region39: #{tpu_custom_call.1} parent=31 // pred_region
          %p240 = scmp.lt.s32.totalorder %s22, 1
          %s241 = scalar_select %p240, %s22, 1
          %p242 = scmp.lt.s32.totalorder %s23, 1
          %s243 = scalar_select %p242, %s23, 1
          %s244 = smul.addr %s241, 2
          %s245 = sadd.s32 %s243, %s244
          %s246 = smul.addr %s245, 8
          %s247 = scalar_lea.vmem %s1, %s246
        $region40: #{tpu_custom_call.1} parent=31 // pred_fallthru
          _
      $region32: #{tpu_custom_call.1} parent=5 // pred_fallthru
        _
      %p248 = scmp.le.s32.totalorder 1, %s15
      %p249 = scmp.lt.s32.totalorder %s15, 5
      %p250 = pnand %p248, %p249
      %p251 = pneg %p250
      // Predicated region
      $region41: #{tpu_custom_call.1} parent=5 // pred_check
        _
      $region42: #{tpu_custom_call.1} parent=5 // pred_check_branch
        %253 = sbr.rel (%p250) target = $region44
      $region43: #{tpu_custom_call.1} parent=5 // pred_region
        %s254 = ssub.s32 %s15, 1
        %p255 = scmp.lt.s32.totalorder %s24, 1
        %s256 = scalar_select %p255, %s24, 1
        %p257 = scmp.lt.s32.totalorder %s25, 1
        %s258 = scalar_select %p257, %s25, 1
        %s259 = smul.addr %s256, 2
        %s260 = sadd.s32 %s258, %s259
        %s261 = smul.addr %s260, 8
        %s262 = scalar_lea.vmem %s0, %s261
        %p263 = pneg %p55
        %p264 = pneg %p52
        %p265 = scmp.lt.s32.totalorder %s24, 1
        %s266 = scalar_select %p265, %s24, 1
        %p267 = scmp.lt.s32.totalorder %s25, 1
        %s268 = scalar_select %p267, %s25, 1
        %s269 = smul.addr %s266, 2
        %s270 = sadd.s32 %s268, %s269
        %s271 = smul.addr %s270, 8
        %s272 = scalar_lea.vmem %s1, %s271
        %p273 = pneg %p83
        %p274 = pneg %p80
        %p275 = pneg %p104
        %p276 = pneg %p101
        %p277 = pneg %p125
        %p278 = pneg %p122
        %p279 = pneg %p146
        %p280 = pneg %p143
        %p281 = pneg %p167
        %p282 = pneg %p164
        %p283 = pneg %p195
        %p284 = pneg %p192
        %s285 = sand.u32 %s182, 1
        %s286 = scalar_lea.sflag [#allocation3], %s285
        %s287 = sand.u32 %s182, 1
        %s288 = smul.addr %s287, 32
        %s289 = scalar_lea.vmem [#allocation2], %s288
        %p290 = scmp.lt.s32.totalorder %s24, 1
        %s291 = scalar_select %p290, %s24, 1
        %p292 = scmp.lt.s32.totalorder %s25, 1
        %s293 = scalar_select %p292, %s25, 1
        %s294 = smul.addr %s291, 2
        %s295 = sadd.s32 %s293, %s294
        %s296 = smul.addr %s295, 8
        %s297 = scalar_lea.vmem %s0, %s296
        %p298 = scmp.lt.s32.totalorder %s24, 1
        %s299 = scalar_select %p298, %s24, 1
        %p300 = scmp.lt.s32.totalorder %s25, 1
        %s301 = scalar_select %p300, %s25, 1
        %s302 = smul.addr %s299, 2
        %s303 = sadd.s32 %s301, %s302
        %s304 = smul.addr %s303, 8
        %s305 = scalar_lea.vmem %s1, %s304
        %v306 = vld [vmem:[%s297] sm:$0xf]
        %v307 = vld [vmem:[%s297 + $0x4] sm:$0xf]
        %v308 = vld [vmem:[%s2] sm:$0xff]
        %v309 = vld [vmem:[%s2 + $0x8] sm:$0xff]
        %v310 = vld [vmem:[%s2 + $0x10] sm:$0xff]
        %v311 = vld [vmem:[%s2 + $0x18] sm:$0xff]
        %s312 = scalar_lea.vmem %s2, 32
        %v313 = vld [vmem:[%s312] sm:$0xff]
        %v314 = vld [vmem:[%s312 + $0x8] sm:$0xff]
        %v315 = vld [vmem:[%s312 + $0x10] sm:$0xff]
        %v316 = vld [vmem:[%s312 + $0x18] sm:$0xff]
        %vm317 = vcmask 31744
        %v319 = vsel %vm317, %v313, 0
        %v322 = vsel %vm317, %v314, 0
        %v325 = vsel %vm317, %v315, 0
        %v328 = vsel %vm317, %v316, 0
        %vm330 = vcmask 1043456
        %v332 = vsel %vm330, %v307, 0
        %334 = vmatprep.subr.mxu0 0.0
        %335 = vmatpush1.msra.mxu0 %v332
        %336 = vmatprep.subr.mxu0 0.0
        %337 = vmatpush1.msra.mxu0 0.0
        %338 = vmatprep.subr.mxu0 0.0
        %339 = vmatpush1.msra.mxu0 0.0
        %340 = vmatprep.subr.mxu0 0.0
        %341 = vmatpush1.msra.mxu0 0.0
        %342 = vmatprep.subr.mxu0 0.0
        %343 = vmatpush1.msra.mxu0 0.0
        %344 = vmatprep.subr.mxu0 0.0
        %345 = vmatpush1.msra.mxu0 0.0
        %346 = vmatprep.subr.mxu0 0.0
        %347 = vmatpush1.msra.mxu0 0.0
        %348 = vmatprep.subr.mxu0 0.0
        %349 = vmatpush1.msra.mxu0 0.0
        %350 = vmatprep.subr.mxu0 0.0
        %351 = vmatpush1.msra.mxu0 0.0
        %352 = vmatprep.subr.mxu0 0.0
        %353 = vmatpush1.msra.mxu0 0.0
        %354 = vmatprep.subr.mxu0 0.0
        %355 = vmatpush1.msra.mxu0 0.0
        %356 = vmatprep.subr.mxu0 0.0
        %357 = vmatpush1.msra.mxu0 0.0
        %358 = vmatprep.subr.mxu0 0.0
        %359 = vmatpush1.msra.mxu0 0.0
        %360 = vmatprep.subr.mxu0 0.0
        %361 = vmatpush1.msra.mxu0 0.0
        %362 = vmatprep.subr.mxu0 0.0
        %363 = vmatpush1.msra.mxu0 0.0
        %364 = vmatprep.subr.mxu0 0.0
        %365 = vmatpush1.msra.mxu0 0.0
        %366 = vmatprep.subr.mxu0 0.0
        %367 = vmatpush1.msra.mxu0 0.0
        %368 = vmatprep.subr.mxu0 0.0
        %369 = vmatpush1.msra.mxu0 0.0
        %370 = vmatprep.subr.mxu0 0.0
        %371 = vmatpush1.msra.mxu0 0.0
        %372 = vmatprep.subr.mxu0 0.0
        %373 = vmatpush1.msra.mxu0 0.0
        %374 = vmatprep.subr.mxu0 0.0
        %375 = vmatpush1.msra.mxu0 0.0
        %376 = vmatprep.subr.mxu0 0.0
        %377 = vmatpush1.msra.mxu0 0.0
        %378 = vmatprep.subr.mxu0 0.0
        %379 = vmatpush1.msra.mxu0 0.0
        %380 = vmatprep.subr.mxu0 0.0
        %381 = vmatpush1.msra.mxu0 0.0
        %382 = vmatprep.subr.mxu0 0.0
        %383 = vmatpush1.msra.mxu0 0.0
        %384 = vmatprep.subr.mxu0 0.0
        %385 = vmatpush1.msra.mxu0 0.0
        %386 = vmatprep.subr.mxu0 0.0
        %387 = vmatpush1.msra.mxu0 0.0
        %388 = vmatprep.subr.mxu0 0.0
        %389 = vmatpush1.msra.mxu0 0.0
        %390 = vmatprep.subr.mxu0 0.0
        %391 = vmatpush1.msra.mxu0 0.0
        %392 = vmatprep.subr.mxu0 0.0
        %393 = vmatpush1.msra.mxu0 0.0
        %394 = vmatprep.subr.mxu0 0.0
        %395 = vmatpush1.msra.mxu0 0.0
        %396 = vmatprep.subr.mxu0 0.0
        %397 = vmatpush1.msra.mxu0 0.0
        %398 = vmatprep.mubr.f32.mxu0 0.0
        %399 = vmatmul.mubr.f32.gmra.mrb[0].mxu0 %v319
        %v400 = vpop.f32.mrb[0].mxu0
        %v401 = vadd.f32 0.0, %v400
        %v402 = vpop.f32.mrb[0].mxu0
        %403 = vmatprep.mubr.f32.mxu0 0.0
        %404 = vmatmul.mubr.f32.gmra.mrb[0].mxu0 %v322
        %v405 = vpop.f32.mrb[0].mxu0
        %v406 = vadd.f32 0.0, %v405
        %v407 = vpop.f32.mrb[0].mxu0
        %408 = vmatprep.mubr.f32.mxu0 0.0
        %409 = vmatmul.mubr.f32.gmra.mrb[0].mxu0 %v325
        %v410 = vpop.f32.mrb[0].mxu0
        %v411 = vadd.f32 0.0, %v410
        %v412 = vpop.f32.mrb[0].mxu0
        %413 = vmatprep.mubr.f32.mxu0 0.0
        %414 = vmatmul.mubr.f32.gmra.mrb[0].mxu0 %v328
        %v415 = vpop.f32.mrb[0].mxu0
        %v416 = vadd.f32 0.0, %v415
        %v417 = vpop.f32.mrb[0].mxu0
        %418 = vdwg.mxu0
        %v420 = vsel %vm317, %v308, 0
        %v423 = vsel %vm317, %v309, 0
        %v426 = vsel %vm317, %v310, 0
        %v429 = vsel %vm317, %v311, 0
        %v432 = vsel %vm330, %v306, 0
        %434 = vmatprep.subr.mxu0 0.0
        %435 = vmatpush1.msra.mxu0 %v432
        %436 = vmatprep.subr.mxu0 0.0
        %437 = vmatpush1.msra.mxu0 0.0
        %438 = vmatprep.subr.mxu0 0.0
        %439 = vmatpush1.msra.mxu0 0.0
        %440 = vmatprep.subr.mxu0 0.0
        %441 = vmatpush1.msra.mxu0 0.0
        %442 = vmatprep.subr.mxu0 0.0
        %443 = vmatpush1.msra.mxu0 0.0
        %444 = vmatprep.subr.mxu0 0.0
        %445 = vmatpush1.msra.mxu0 0.0
        %446 = vmatprep.subr.mxu0 0.0
        %447 = vmatpush1.msra.mxu0 0.0
        %448 = vmatprep.subr.mxu0 0.0
        %449 = vmatpush1.msra.mxu0 0.0
        %450 = vmatprep.subr.mxu0 0.0
        %451 = vmatpush1.msra.mxu0 0.0
        %452 = vmatprep.subr.mxu0 0.0
        %453 = vmatpush1.msra.mxu0 0.0
        %454 = vmatprep.subr.mxu0 0.0
        %455 = vmatpush1.msra.mxu0 0.0
        %456 = vmatprep.subr.mxu0 0.0
        %457 = vmatpush1.msra.mxu0 0.0
        %458 = vmatprep.subr.mxu0 0.0
        %459 = vmatpush1.msra.mxu0 0.0
        %460 = vmatprep.subr.mxu0 0.0
        %461 = vmatpush1.msra.mxu0 0.0
        %462 = vmatprep.subr.mxu0 0.0
        %463 = vmatpush1.msra.mxu0 0.0
        %464 = vmatprep.subr.mxu0 0.0
        %465 = vmatpush1.msra.mxu0 0.0
        %466 = vmatprep.subr.mxu0 0.0
        %467 = vmatpush1.msra.mxu0 0.0
        %468 = vmatprep.subr.mxu0 0.0
        %469 = vmatpush1.msra.mxu0 0.0
        %470 = vmatprep.subr.mxu0 0.0
        %471 = vmatpush1.msra.mxu0 0.0
        %472 = vmatprep.subr.mxu0 0.0
        %473 = vmatpush1.msra.mxu0 0.0
        %474 = vmatprep.subr.mxu0 0.0
        %475 = vmatpush1.msra.mxu0 0.0
        %476 = vmatprep.subr.mxu0 0.0
        %477 = vmatpush1.msra.mxu0 0.0
        %478 = vmatprep.subr.mxu0 0.0
        %479 = vmatpush1.msra.mxu0 0.0
        %480 = vmatprep.subr.mxu0 0.0
        %481 = vmatpush1.msra.mxu0 0.0
        %482 = vmatprep.subr.mxu0 0.0
        %483 = vmatpush1.msra.mxu0 0.0
        %484 = vmatprep.subr.mxu0 0.0
        %485 = vmatpush1.msra.mxu0 0.0
        %486 = vmatprep.subr.mxu0 0.0
        %487 = vmatpush1.msra.mxu0 0.0
        %488 = vmatprep.subr.mxu0 0.0
        %489 = vmatpush1.msra.mxu0 0.0
        %490 = vmatprep.subr.mxu0 0.0
        %491 = vmatpush1.msra.mxu0 0.0
        %492 = vmatprep.subr.mxu0 0.0
        %493 = vmatpush1.msra.mxu0 0.0
        %494 = vmatprep.subr.mxu0 0.0
        %495 = vmatpush1.msra.mxu0 0.0
        %496 = vmatprep.subr.mxu0 0.0
        %497 = vmatpush1.msra.mxu0 0.0
        %498 = vmatprep.mubr.f32.mxu0 0.0
        %499 = vmatmul.mubr.f32.gmra.mrb[0].mxu0 %v420
        %v500 = vpop.f32.mrb[0].mxu0
        %v501 = vadd.f32 %v401, %v500
        %v502 = vpop.f32.mrb[0].mxu0
        %503 = vmatprep.mubr.f32.mxu0 0.0
        %504 = vmatmul.mubr.f32.gmra.mrb[0].mxu0 %v423
        %v505 = vpop.f32.mrb[0].mxu0
        %v506 = vadd.f32 %v406, %v505
        %v507 = vpop.f32.mrb[0].mxu0
        %508 = vmatprep.mubr.f32.mxu0 0.0
        %509 = vmatmul.mubr.f32.gmra.mrb[0].mxu0 %v426
        %v510 = vpop.f32.mrb[0].mxu0
        %v511 = vadd.f32 %v411, %v510
        %v512 = vpop.f32.mrb[0].mxu0
        %513 = vmatprep.mubr.f32.mxu0 0.0
        %514 = vmatmul.mubr.f32.gmra.mrb[0].mxu0 %v429
        %v515 = vpop.f32.mrb[0].mxu0
        %v516 = vadd.f32 %v416, %v515
        %v517 = vpop.f32.mrb[0].mxu0
        %518 = vdwg.mxu0
        %v519 = vld [vmem:[%s305] sm:$0xf]
        %520 = vrot.lane.b32.xlu0 %v306, 127
        %v521 = vpop.permute.xlu0 %520
        %524 = vrot.lane.b32.xlu0 %v519, 127
        %v525 = vpop.permute.xlu0 %524
        %vm527 = vcmask 1039360
        %v528 = vsel %vm527, %v521, %v525
        %s529 = scalar_lea.vmem %s2, 64
        %v530 = vld [vmem:[%s529] sm:$0xff]
        %v531 = vld [vmem:[%s529 + $0x8] sm:$0xff]
        %v532 = vld [vmem:[%s529 + $0x10] sm:$0xff]
        %v533 = vld [vmem:[%s529 + $0x18] sm:$0xff]
        %v535 = vsel %vm317, %v530, 0
        %v538 = vsel %vm317, %v531, 0
        %v541 = vsel %vm317, %v532, 0
        %v544 = vsel %vm317, %v533, 0
        %v547 = vsel %vm330, %v528, 0
        %549 = vmatprep.subr.mxu0 0.0
        %550 = vmatpush1.msra.mxu0 %v547
        %551 = vmatprep.subr.mxu0 0.0
        %552 = vmatpush1.msra.mxu0 0.0
        %553 = vmatprep.subr.mxu0 0.0
        %554 = vmatpush1.msra.mxu0 0.0
        %555 = vmatprep.subr.mxu0 0.0
        %556 = vmatpush1.msra.mxu0 0.0
        %557 = vmatprep.subr.mxu0 0.0
        %558 = vmatpush1.msra.mxu0 0.0
        %559 = vmatprep.subr.mxu0 0.0
        %560 = vmatpush1.msra.mxu0 0.0
        %561 = vmatprep.subr.mxu0 0.0
        %562 = vmatpush1.msra.mxu0 0.0
        %563 = vmatprep.subr.mxu0 0.0
        %564 = vmatpush1.msra.mxu0 0.0
        %565 = vmatprep.subr.mxu0 0.0
        %566 = vmatpush1.msra.mxu0 0.0
        %567 = vmatprep.subr.mxu0 0.0
        %568 = vmatpush1.msra.mxu0 0.0
        %569 = vmatprep.subr.mxu0 0.0
        %570 = vmatpush1.msra.mxu0 0.0
        %571 = vmatprep.subr.mxu0 0.0
        %572 = vmatpush1.msra.mxu0 0.0
        %573 = vmatprep.subr.mxu0 0.0
        %574 = vmatpush1.msra.mxu0 0.0
        %575 = vmatprep.subr.mxu0 0.0
        %576 = vmatpush1.msra.mxu0 0.0
        %577 = vmatprep.subr.mxu0 0.0
        %578 = vmatpush1.msra.mxu0 0.0
        %579 = vmatprep.subr.mxu0 0.0
        %580 = vmatpush1.msra.mxu0 0.0
        %581 = vmatprep.subr.mxu0 0.0
        %582 = vmatpush1.msra.mxu0 0.0
        %583 = vmatprep.subr.mxu0 0.0
        %584 = vmatpush1.msra.mxu0 0.0
        %585 = vmatprep.subr.mxu0 0.0
        %586 = vmatpush1.msra.mxu0 0.0
        %587 = vmatprep.subr.mxu0 0.0
        %588 = vmatpush1.msra.mxu0 0.0
        %589 = vmatprep.subr.mxu0 0.0
        %590 = vmatpush1.msra.mxu0 0.0
        %591 = vmatprep.subr.mxu0 0.0
        %592 = vmatpush1.msra.mxu0 0.0
        %593 = vmatprep.subr.mxu0 0.0
        %594 = vmatpush1.msra.mxu0 0.0
        %595 = vmatprep.subr.mxu0 0.0
        %596 = vmatpush1.msra.mxu0 0.0
        %597 = vmatprep.subr.mxu0 0.0
        %598 = vmatpush1.msra.mxu0 0.0
        %599 = vmatprep.subr.mxu0 0.0
        %600 = vmatpush1.msra.mxu0 0.0
        %601 = vmatprep.subr.mxu0 0.0
        %602 = vmatpush1.msra.mxu0 0.0
        %603 = vmatprep.subr.mxu0 0.0
        %604 = vmatpush1.msra.mxu0 0.0
        %605 = vmatprep.subr.mxu0 0.0
        %606 = vmatpush1.msra.mxu0 0.0
        %607 = vmatprep.subr.mxu0 0.0
        %608 = vmatpush1.msra.mxu0 0.0
        %609 = vmatprep.subr.mxu0 0.0
        %610 = vmatpush1.msra.mxu0 0.0
        %611 = vmatprep.subr.mxu0 0.0
        %612 = vmatpush1.msra.mxu0 0.0
        %613 = vmatprep.mubr.f32.mxu0 0.0
        %614 = vmatmul.mubr.f32.gmra.mrb[0].mxu0 %v535
        %v615 = vpop.f32.mrb[0].mxu0
        %v616 = vadd.f32 0.0, %v615
        %v617 = vpop.f32.mrb[0].mxu0
        %618 = vmatprep.mubr.f32.mxu0 0.0
        %619 = vmatmul.mubr.f32.gmra.mrb[0].mxu0 %v538
        %v620 = vpop.f32.mrb[0].mxu0
        %v621 = vadd.f32 0.0, %v620
        %v622 = vpop.f32.mrb[0].mxu0
        %623 = vmatprep.mubr.f32.mxu0 0.0
        %624 = vmatmul.mubr.f32.gmra.mrb[0].mxu0 %v541
        %v625 = vpop.f32.mrb[0].mxu0
        %v626 = vadd.f32 0.0, %v625
        %v627 = vpop.f32.mrb[0].mxu0
        %628 = vmatprep.mubr.f32.mxu0 0.0
        %629 = vmatmul.mubr.f32.gmra.mrb[0].mxu0 %v544
        %v630 = vpop.f32.mrb[0].mxu0
        %v631 = vadd.f32 0.0, %v630
        %v632 = vpop.f32.mrb[0].mxu0
        %633 = vdwg.mxu0
        %v634 = vadd.f32 %v501, %v616
        %v635 = vadd.f32 %v506, %v621
        %v636 = vadd.f32 %v511, %v626
        %v637 = vadd.f32 %v516, %v631
        %v638 = vld [vmem:[%s3] sm:$0xff]
        %v639 = vld [vmem:[%s3 + $0x8] sm:$0xff]
        %v640 = vld [vmem:[%s3 + $0x10] sm:$0xff]
        %v641 = vld [vmem:[%s3 + $0x18] sm:$0xff]
        %643 = vset.pattern.permute.xlu0 0
        %644 = vperm.xlu0 %643, %v638
        %v645 = vpop.permute.xlu0 %644
        %648 = vset.pattern.permute.xlu0 0
        %649 = vperm.xlu0 %648, %v639
        %v650 = vpop.permute.xlu0 %649
        %653 = vset.pattern.permute.xlu0 0
        %654 = vperm.xlu0 %653, %v640
        %v655 = vpop.permute.xlu0 %654
        %658 = vset.pattern.permute.xlu0 0
        %659 = vperm.xlu0 %658, %v641
        %v660 = vpop.permute.xlu0 %659
        %v662 = vadd.f32 %v634, %v645
        %v663 = vadd.f32 %v635, %v650
        %v664 = vadd.f32 %v636, %v655
        %v665 = vadd.f32 %v637, %v660
        %v666 = vadd.f32 %v662, %v663
        %v667 = vadd.f32 %v666, %v664
        %v668 = vadd.f32 %v667, %v665
        %v669 = vrot.slane %v668, 4
        %v670 = vadd.f32 %v668, %v669
        %v671 = vrot.slane %v670, 2
        %v672 = vadd.f32 %v670, %v671
        %v673 = vrot.slane %v672, 1
        %v674 = vadd.f32 %v672, %v673
        %v675 = vrcp.pop 32.0
        %v676 = vmul.f32 %v674, %v675
        %v677 = vsub.f32 %v662, %v676
        %v678 = vsub.f32 %v663, %v676
        %v679 = vsub.f32 %v664, %v676
        %v680 = vsub.f32 %v665, %v676
        %v681 = vmul.f32 %v677, %v677
        %v682 = vmul.f32 %v678, %v678
        %v683 = vmul.f32 %v679, %v679
        %v684 = vmul.f32 %v680, %v680
        %v685 = vadd.f32 %v681, %v682
        %v686 = vadd.f32 %v685, %v683
        %v687 = vadd.f32 %v686, %v684
        %v688 = vrot.slane %v687, 4
        %v689 = vadd.f32 %v687, %v688
        %v690 = vrot.slane %v689, 2
        %v691 = vadd.f32 %v689, %v690
        %v692 = vrot.slane %v691, 1
        %v693 = vadd.f32 %v691, %v692
        %v694 = vmul.f32 %v693, %v675
        %v695 = vadd.f32 %v694, 1e-05
        %v696 = vrsqrt.pop %v695
        %v697 = vmul.f32 %v677, %v696
        %v698 = vmul.f32 %v678, %v696
        %v699 = vmul.f32 %v679, %v696
        %v700 = vmul.f32 %v680, %v696
        %v701 = vld [vmem:[%s4] sm:$0xff]
        %v702 = vld [vmem:[%s4 + $0x8] sm:$0xff]
        %v703 = vld [vmem:[%s4 + $0x10] sm:$0xff]
        %v704 = vld [vmem:[%s4 + $0x18] sm:$0xff]
        %706 = vset.pattern.permute.xlu0 0
        %707 = vperm.xlu0 %706, %v701
        %v708 = vpop.permute.xlu0 %707
        %711 = vset.pattern.permute.xlu0 0
        %712 = vperm.xlu0 %711, %v702
        %v713 = vpop.permute.xlu0 %712
        %716 = vset.pattern.permute.xlu0 0
        %717 = vperm.xlu0 %716, %v703
        %v718 = vpop.permute.xlu0 %717
        %721 = vset.pattern.permute.xlu0 0
        %722 = vperm.xlu0 %721, %v704
        %v723 = vpop.permute.xlu0 %722
        %v725 = vmul.f32 %v697, %v708
        %v726 = vmul.f32 %v698, %v713
        %v727 = vmul.f32 %v699, %v718
        %v728 = vmul.f32 %v700, %v723
        %v729 = vld [vmem:[%s5] sm:$0xff]
        %v730 = vld [vmem:[%s5 + $0x8] sm:$0xff]
        %v731 = vld [vmem:[%s5 + $0x10] sm:$0xff]
        %v732 = vld [vmem:[%s5 + $0x18] sm:$0xff]
        %734 = vset.pattern.permute.xlu0 0
        %735 = vperm.xlu0 %734, %v729
        %v736 = vpop.permute.xlu0 %735
        %739 = vset.pattern.permute.xlu0 0
        %740 = vperm.xlu0 %739, %v730
        %v741 = vpop.permute.xlu0 %740
        %744 = vset.pattern.permute.xlu0 0
        %745 = vperm.xlu0 %744, %v731
        %v746 = vpop.permute.xlu0 %745
        %749 = vset.pattern.permute.xlu0 0
        %750 = vperm.xlu0 %749, %v732
        %v751 = vpop.permute.xlu0 %750
        %v753 = vadd.f32 %v725, %v736
        %v754 = vadd.f32 %v726, %v741
        %v755 = vadd.f32 %v727, %v746
        %v756 = vadd.f32 %v728, %v751
        %v757 = vmul.f32 %v753, 0.5
        %v758 = vmul.f32 %v754, 0.5
        %v759 = vmul.f32 %v755, 0.5
        %v760 = vmul.f32 %v756, 0.5
        %v761 = vmul.f32 %v753, 0.70710677
        %v762 = vmul.f32 %v754, 0.70710677
        %v763 = vmul.f32 %v755, 0.70710677
        %v764 = vmul.f32 %v756, 0.70710677
        %v765 = verf.f32.pop %v761
        %v766 = verf.f32.pop %v762
        %v767 = verf.f32.pop %v763
        %v768 = verf.f32.pop %v764
        %v769 = vadd.f32 %v765, 1.0
        %v770 = vadd.f32 %v766, 1.0
        %v771 = vadd.f32 %v767, 1.0
        %v772 = vadd.f32 %v768, 1.0
        %v773 = vmul.f32 %v757, %v769
        %v774 = vmul.f32 %v758, %v770
        %v775 = vmul.f32 %v759, %v771
        %v776 = vmul.f32 %v760, %v772
        %777 = vst [vmem:[%s289] sm:$0xff] %v773
        %778 = vst [vmem:[%s289 + $0x8] sm:$0xff] %v774
        %779 = vst [vmem:[%s289 + $0x10] sm:$0xff] %v775
        %780 = vst [vmem:[%s289 + $0x18] sm:$0xff] %v776
        %s781 = sand.u32 %s182, 1
        %s782 = scalar_lea.sflag [#allocation3], %s781
        %s783 = sand.u32 %s182, 1
        %s784 = smul.addr %s783, 32
        %s785 = scalar_lea.vmem [#allocation2], %s784
        // Predicated region
        $region45: #{tpu_custom_call.1} parent=43 // pred_check
          %p786 = pneg %p192
        $region46: #{tpu_custom_call.1} parent=43 // pred_check_branch
          %788 = sbr.rel (%p786) target = $region48
        $region47: #{tpu_custom_call.1} parent=43 // pred_region
          %s790 = ssub.s32 512, 512
          %791 = vsyncadd %s782, %s790
          %s792 = smul.addr %s24, 8
          %s793 = sadd.s32 %s25, %s792
          %s794 = smul.addr %s793, 128
          %s795 = scalar_lea.hbm %s6, %s794
          %s796 = sshll.u32 %s785, 4
          %s797 = int_to_ptr.vmem [resolvable:$true] %s796
          %802 = dma.vmem_to_hbm [thread:$0]  %s797, 512, %s795, %s782, 128, 256, 8
        $region48: #{tpu_custom_call.1} parent=43 // pred_fallthru
          _
      $region44: #{tpu_custom_call.1} parent=5 // pred_fallthru
        _
      %p803 = scmp.le.s32.totalorder 2, %s15
      // Predicated region
      $region49: #{tpu_custom_call.1} parent=5 // pred_check
        %p804 = pneg %p803
      $region50: #{tpu_custom_call.1} parent=5 // pred_check_branch
        %806 = sbr.rel (%p804) target = $region52
      $region51: #{tpu_custom_call.1} parent=5 // pred_region
        %s807 = ssub.s32 %s15, 2
        // Predicated region
        $region53: #{tpu_custom_call.1} parent=51 // pred_check
          %p808 = pneg %p198
        $region54: #{tpu_custom_call.1} parent=51 // pred_check_branch
          %810 = sbr.rel (%p808) target = $region56
        $region55: #{tpu_custom_call.1} parent=51 // pred_region
          %s811 = sand.u32 %s183, 1
          %s812 = scalar_lea.sflag [#allocation3], %s811
          %s813 = sand.u32 %s183, 1
          %s814 = smul.addr %s813, 32
          %s815 = scalar_lea.vmem [#allocation2], %s814
          %816 = dma.done %s812, 512
        $region56: #{tpu_custom_call.1} parent=51 // pred_fallthru
          _
      $region52: #{tpu_custom_call.1} parent=5 // pred_fallthru
        _
    $region6: #{tpu_custom_call.1} parent=1 // loop_footer
      %s19 = sadd.s32 1, %s15
    $region7: #{tpu_custom_call.1} parent=1 // loop_footer_branch
      %14 = sbr.rel target = $region3
    $region8: #{tpu_custom_call.1} parent=1 // loop_exit
      _
    %817 = vsyncpa [#allocation3], 1
    %s818 = scalar_lea.sflag [#allocation3], 1
    %819 = vsyncpa %s818, 1

</llo_original>
